<compile_context>
chip_gen: v5e
topology: v5e:2x2
jax: 0.10.0
libtpu: 0.0.40
codegen_flags: <defaults>
</compile_context>

<pallas_src>
import functools

import jax
import jax.numpy as jnp
from jax import lax
from jax.experimental import pallas as pl
from jax.experimental.pallas import tpu as pltpu


def _pick_tile(n, preferred=(256, 128, 64, 32, 16)):
    """Largest MXU/layout-friendly tile that divides n, else the full dim."""
    for p in preferred:
        if p <= n and n % p == 0:
            return p
    return n


def _vmem_capacity_bytes():
    try:
        return int(pltpu.get_tpu_info().vmem_capacity_bytes)
    except Exception:
        return 64 * 1024 * 1024          # conservative fallback (v7x per-core VMEM)


def _attn_vmem_bytes(tq, tk, H, hs, C):
    """Rough per-grid-step VMEM footprint of the attention kernel (double-buffered blocks)."""
    bf, f32 = 2, 4
    blocks = 2 * (H * tq * hs * bf            # K row tile
                  + 2 * H * tk * hs * bf      # Q / V column tiles
                  + tq * C * f32)             # output tile
    weights = 2 * (C * C * bf + C * f32)      # Wp / bp
    scratch = (2 * H * tq + H * tq * hs + tq * C) * f32
    interm = 4 * H * tq * tk * f32            # scores / probs / temporaries
    return blocks + weights + scratch + interm


# ---------------------------------------------------------------------------
# Stage 1: fused QKV projection (one wide contraction-depth-C matmul per row tile)
# ---------------------------------------------------------------------------
def _qkv_proj_kernel(x_ref, w_ref, b_ref, o_ref):
    acc = jnp.dot(x_ref[...], w_ref[...], preferred_element_type=jnp.float32)
    o_ref[...] = (acc + b_ref[...]).astype(o_ref.dtype)


# ---------------------------------------------------------------------------
# Stage 2: flash-style causal attention + fused output projection
# ---------------------------------------------------------------------------
def _attn_kernel(k_ref, q_ref, v_ref, wp_ref, bp_ref, o_ref,
                 m_s, l_s, acc_s, cat_s, *, tq, tk, num_heads, head_size):
    i = pl.program_id(1)           # query-row tile
    kv = pl.program_id(2)          # key/value column tile (innermost, "arbitrary")
    nkv = pl.num_programs(2)
    row0 = i * tq
    col0 = kv * tk
    kv_last = (row0 + tq - 1) // tk        # last column block kept by the causal mask

    @pl.when(kv == 0)
    def _init():
        m_s[...] = jnp.full(m_s.shape, -jnp.inf, jnp.float32)
        l_s[...] = jnp.zeros(l_s.shape, jnp.float32)
        acc_s[...] = jnp.zeros(acc_s.shape, jnp.float32)

    @pl.when(kv <= kv_last)                 # skip blocks entirely above the diagonal
    def _compute():
        kb = k_ref[...]                     # (H, tq, hs) bf16  -- output-row operand
        qb = q_ref[...]                     # (H, tk, hs) bf16  -- column operand
        vb = v_ref[...]                     # (H, tk, hs) bf16

        # scores = k @ q^T (reference ordering, no 1/sqrt(d) scaling); head = batch dim.
        s = jnp.einsum('hqd,hkd->hqk', kb, qb,
                       preferred_element_type=jnp.float32)          # (H, tq, tk)

        rows = row0 + lax.broadcasted_iota(jnp.int32, (tq, tk), 0)
        cols = col0 + lax.broadcasted_iota(jnp.int32, (tq, tk), 1)
        keep = rows >= cols                                          # causal (tril)
        s = jnp.where(keep[None, :, :], s, -jnp.inf)

        # online (flash) softmax update
        m_prev = m_s[...]                                            # (H, tq, 1)
        m_new = jnp.maximum(m_prev, jnp.max(s, axis=-1, keepdims=True))
        alpha = jnp.exp(m_prev - m_new)
        p = jnp.exp(s - m_new)
        l_s[...] = alpha * l_s[...] + jnp.sum(p, axis=-1, keepdims=True)
        acc_s[...] = alpha * acc_s[...] + jnp.einsum(
            'hqk,hkd->hqd', p.astype(vb.dtype), vb,
            preferred_element_type=jnp.float32)                      # (H, tq, hs)
        m_s[...] = m_new

    @pl.when(kv == nkv - 1)
    def _finalize():
        hs = head_size
        inv_l = pl.reciprocal(l_s[...], approx=True)                 # (H, tq, 1), EUP slot
        # Lay the normalized heads into one lane-dense (tq, C) slab (once per tile) so the
        # output projection is a single contraction-depth-C MXU matmul.
        for h in range(num_heads):
            cat_s[:, h * hs:(h + 1) * hs] = acc_s[h] * inv_l[h]
        o = jnp.dot(cat_s[...].astype(wp_ref.dtype), wp_ref[...],
                    preferred_element_type=jnp.float32) + bp_ref[...]
        o_ref[...] = o.astype(o_ref.dtype)


def multi_head_attention(x, params, *, num_heads, head_size):
    B, T, C = x.shape
    H, hs = num_heads, head_size
    assert H * hs == C
    wk, bk, wq, bq, wv, bv, wp, bp = params
    cdt = jnp.bfloat16        # MXU input dtype: 2x f32 throughput, half the HBM bytes

    # ---- weight layout plumbing (wrapper side) ----
    stack_w = lambda w: jnp.transpose(w, (1, 0, 2)).reshape(C, C)     # (H,C,hs) -> (C, H*hs)
    w_qkv = jnp.concatenate([stack_w(wk), stack_w(wq), stack_w(wv)],
                            axis=1).astype(cdt)                       # (C, 3C)
    b_qkv = jnp.concatenate([bk.reshape(-1), bq.reshape(-1), bv.reshape(-1)]
                            ).reshape(1, 3 * C).astype(jnp.float32)
    wp_c = wp.astype(cdt)
    bp_c = bp.reshape(1, C).astype(jnp.float32)

    vmem_cap = _vmem_capacity_bytes()
    vmem_limit = min(vmem_cap * 3 // 4, 96 * 1024 * 1024)

    # ---------------- stage 1: fused QKV projection (computed once) ----------------
    BT = B * T
    x2d = x.reshape(BT, C).astype(cdt)
    tm = _pick_tile(BT)
    qkv = pl.pallas_call(
        _qkv_proj_kernel,
        out_shape=jax.ShapeDtypeStruct((BT, 3 * C), cdt),
        grid=(BT // tm,),
        in_specs=[
            pl.BlockSpec((tm, C), lambda r: (r, 0)),
            pl.BlockSpec((C, 3 * C), lambda r: (0, 0)),
            pl.BlockSpec((1, 3 * C), lambda r: (0, 0)),
        ],
        out_specs=pl.BlockSpec((tm, 3 * C), lambda r: (r, 0)),
        compiler_params=pltpu.CompilerParams(
            dimension_semantics=("parallel",),
            vmem_limit_bytes=vmem_limit),
        cost_estimate=pl.CostEstimate(
            flops=2 * BT * C * 3 * C, transcendentals=0,
            bytes_accessed=2 * (BT * C + 3 * C * C + BT * 3 * C)),
    )(x2d, w_qkv, b_qkv)

    # Layout plumbing only: split heads so the attention kernel gets (B, H, T, hs) blocks
    # (head as a batch dim of the einsums -> no per-head lane slicing in the hot loop).
    qkv = qkv.reshape(B, T, 3, H, hs)
    k = jnp.transpose(qkv[:, :, 0], (0, 2, 1, 3))     # (B, H, T, hs)
    q = jnp.transpose(qkv[:, :, 1], (0, 2, 1, 3))
    v = jnp.transpose(qkv[:, :, 2], (0, 2, 1, 3))

    # ---------------- stage 2: flash-style attention + fused output projection ----------------
    tq = _pick_tile(T)
    tk = _pick_tile(T)
    budget = vmem_cap // 2
    for _ in range(16):                     # VMEM-budget-aware shrink (v7x 64 MiB vs v5e/v6e 128 MiB)
        if _attn_vmem_bytes(tq, tk, H, hs, C) <= budget:
            break
        if tk >= tq and tk % 32 == 0:
            tk //= 2
        elif tq % 32 == 0:
            tq //= 2
        else:
            break
    if B * (T // tq) < 2 and tq % 32 == 0:  # keep both v7x TensorCores busy
        tq //= 2

    nkv = T // tk
    kv_clamp = lambda i, kv: jnp.minimum(kv, ((i + 1) * tq - 1) // tk)

    kernel = functools.partial(_attn_kernel, tq=tq, tk=tk,
                               num_heads=H, head_size=hs)
    out = pl.pallas_call(
        kernel,
        out_shape=jax.ShapeDtypeStruct((B, T, C), x.dtype),
        grid=(B, T // tq, nkv),
        in_specs=[
            pl.BlockSpec((None, H, tq, hs), lambda b, i, kv: (b, 0, i, 0)),
            pl.BlockSpec((None, H, tk, hs),
                         lambda b, i, kv: (b, 0, kv_clamp(i, kv), 0)),
            pl.BlockSpec((None, H, tk, hs),
                         lambda b, i, kv: (b, 0, kv_clamp(i, kv), 0)),
            pl.BlockSpec((C, C), lambda b, i, kv: (0, 0)),
            pl.BlockSpec((1, C), lambda b, i, kv: (0, 0)),
        ],
        out_specs=pl.BlockSpec((None, tq, C), lambda b, i, kv: (b, i, 0)),
        scratch_shapes=[
            pltpu.VMEM((H, tq, 1), jnp.float32),      # running max
            pltpu.VMEM((H, tq, 1), jnp.float32),      # running sum
            pltpu.VMEM((H, tq, hs), jnp.float32),     # per-head accumulator
            pltpu.VMEM((tq, C), jnp.float32),         # lane-dense concat for out-proj
        ],
        compiler_params=pltpu.CompilerParams(
            dimension_semantics=("parallel", "parallel", "arbitrary"),
            vmem_limit_bytes=vmem_limit),
        cost_estimate=pl.CostEstimate(
            flops=2 * B * T * T * C + 2 * B * T * C * C,
            transcendentals=B * H * T * T // 2,
            bytes_accessed=2 * 3 * B * T * C + 2 * C * C + 4 * B * T * C),
    )(k, q, v, wp_c, bp_c)
    return out


def _reference(x, params, *, num_heads, head_size):
    """Pure-JAX f32 reference mirroring the PyTorch forward (dropout = identity)."""
    wk, bk, wq, bq, wv, bv, wp, bp = params
    B, T, C = x.shape
    outs = []
    tril = jnp.tril(jnp.ones((T, T)))
    for h in range(num_heads):
        k = x @ wk[h] + bk[h]
        q = x @ wq[h] + bq[h]
        v = x @ wv[h] + bv[h]
        w = jnp.einsum('btd,bsd->bts', k, q)
        w = jnp.where(tril == 0, -jnp.inf, w)
        w = jax.nn.softmax(w, axis=-1)
        outs.append(jnp.einsum('bts,bsd->btd', w, v))
    cat = jnp.concatenate(outs, axis=-1)
    return cat @ wp + bp


if __name__ == "__main__":
    # Small shapes consistent with the module: num_heads * head_size == channel_size.
    B, T, C = 2, 8, 32
    num_heads, head_size = 4, 8
    assert num_heads * head_size == C

    key = jax.random.PRNGKey(0)
    ks = jax.random.split(key, 9)
    scale = 1.0 / jnp.sqrt(jnp.float32(C))
    wk = jax.random.normal(ks[0], (num_heads, C, head_size), jnp.float32) * scale
    bk = jax.random.normal(ks[1], (num_heads, head_size), jnp.float32) * 0.1
    wq = jax.random.normal(ks[2], (num_heads, C, head_size), jnp.float32) * scale
    bq = jax.random.normal(ks[3], (num_heads, head_size), jnp.float32) * 0.1
    wv = jax.random.normal(ks[4], (num_heads, C, head_size), jnp.float32) * scale
    bv = jax.random.normal(ks[5], (num_heads, head_size), jnp.float32) * 0.1
    wp = jax.random.normal(ks[6], (C, C), jnp.float32) * scale
    bp = jax.random.normal(ks[7], (C,), jnp.float32) * 0.1
    params = (wk, bk, wq, bq, wv, bv, wp, bp)

    x = jax.random.normal(ks[8], (B, T, C), jnp.float32)

    out = multi_head_attention(x, params, num_heads=num_heads, head_size=head_size)
    out = jax.block_until_ready(out)

    ref = _reference(x, params, num_heads=num_heads, head_size=head_size)
    assert out.shape == (B, T, C)
    # bf16 MXU inputs (per perf review) + EUP approx reciprocal => relaxed tolerance vs f32 ref.
    assert jnp.allclose(out, ref, atol=1e-1, rtol=1e-1), (
        "mismatch vs JAX reference (max abs err "
        f"{float(jnp.max(jnp.abs(out - ref)))})")

    print("KERNEL_OK")
</pallas_src>

<mosaic_0001>
module attributes {stable_mosaic.version = 11 : i64} {
  func.func @_qkv_proj_kernel(%arg0: i32, %arg1: memref<16x32xbf16, #tpu.memory_space<vmem>>, %arg2: memref<32x96xbf16, #tpu.memory_space<vmem>>, %arg3: memref<1x96xf32, #tpu.memory_space<vmem>>, %arg4: memref<16x96xbf16, #tpu.memory_space<vmem>>) attributes {dimension_semantics = [#tpu.dimension_semantics<parallel>], iteration_bounds = array<i64: 1>, scalar_prefetch = 0 : i64, scratch_operands = 0 : i64, tpu.core_type = #tpu.core_type<tc>, window_params = [{transform_indices = @transform_0, window_bounds = array<i64: 16, 32>}, {pipeline_mode = #tpu.pipeline_mode<synchronous>, transform_indices = @transform_1, window_bounds = array<i64: 32, 96>}, {pipeline_mode = #tpu.pipeline_mode<synchronous>, transform_indices = @transform_2, window_bounds = array<i64: 1, 96>}, {transform_indices = @transform_3, window_bounds = array<i64: 16, 96>}]} {
    %c0 = arith.constant 0 : index
    %c0_0 = arith.constant 0 : index
    %0 = vector.load %arg1[%c0, %c0_0] : memref<16x32xbf16, #tpu.memory_space<vmem>>, vector<16x32xbf16>
    %c0_1 = arith.constant 0 : index
    %c0_2 = arith.constant 0 : index
    %1 = vector.load %arg2[%c0_1, %c0_2] : memref<32x96xbf16, #tpu.memory_space<vmem>>, vector<32x96xbf16>
    %cst = arith.constant dense<0.000000e+00> : vector<16x96xf32>
    %2 = tpu.matmul %0, %1, %cst {dimension_numbers = #tpu.dot_dimension_numbers<[1], [0], [0], [1], [0, 0, 1, 1], [], []>} : vector<16x32xbf16>, vector<32x96xbf16>, vector<16x96xf32> -> vector<16x96xf32>
    %c0_3 = arith.constant 0 : index
    %c0_4 = arith.constant 0 : index
    %3 = vector.load %arg3[%c0_3, %c0_4] : memref<1x96xf32, #tpu.memory_space<vmem>>, vector<1x96xf32>
    %4 = vector.broadcast %3 : vector<1x96xf32> to vector<16x96xf32>
    %5 = arith.addf %2, %4 : vector<16x96xf32>
    %6 = arith.truncf %5 : vector<16x96xf32> to vector<16x96xbf16>
    %c0_5 = arith.constant 0 : index
    %c0_6 = arith.constant 0 : index
    %7 = vector.load %arg4[%c0_5, %c0_6] : memref<16x96xbf16, #tpu.memory_space<vmem>>, vector<16x96xbf16>
    tpu.vector_store %arg4[%c0_5, %c0_6], %6 {strides = array<i32>} : memref<16x96xbf16, #tpu.memory_space<vmem>>, vector<16x96xbf16>,
    return
  }
  func.func @transform_0(%arg0: i32) -> (i32, i32) {
    %c0_i32 = arith.constant 0 : i32
    %c0_i32_0 = arith.constant 0 : i32
    return %arg0, %c0_i32 : i32, i32
  }
  func.func @transform_1(%arg0: i32) -> (i32, i32) {
    %c0_i32 = arith.constant 0 : i32
    %c0_i32_0 = arith.constant 0 : i32
    %c0_i32_1 = arith.constant 0 : i32
    return %c0_i32, %c0_i32_0 : i32, i32
  }
  func.func @transform_2(%arg0: i32) -> (i32, i32) {
    %c0_i32 = arith.constant 0 : i32
    %c0_i32_0 = arith.constant 0 : i32
    %c0_i32_1 = arith.constant 0 : i32
    return %c0_i32, %c0_i32_0 : i32, i32
  }
  func.func @transform_3(%arg0: i32) -> (i32, i32) {
    %c0_i32 = arith.constant 0 : i32
    %c0_i32_0 = arith.constant 0 : i32
    return %arg0, %c0_i32 : i32, i32
  }
}

</mosaic_0001>

<llo_original>
// kernel: tpu_custom_call.1
$region0: #{tpu_custom_call.1}
  #allocation0 [shape = 'u32[]', space=smem, size = 0x4, offset = 0x4, fixed_abs, tag = 'smem constant byte address 0x4 - core index']
  #allocation1 [shape = 'u32[72,128]{1,0:T(1,128)}', space=vmem, size = 0x9000, scoped, tag = 'internal scratch']
  %s0 = inlined_call_operand.hbm [shape: bf16[16,32], index: 0, kind: input, shape index: {}]
  %s1 = inlined_call_operand.hbm [shape: bf16[32,96], index: 1, kind: input, shape index: {}]
  %s2 = inlined_call_operand.vmem [shape: f32[1,96], index: 2, kind: input, shape index: {}]
  %s3 = inlined_call_operand.hbm [shape: bf16[16,96], index: 3, kind: output, shape index: {}]
  %s4 = sld [smem:[#allocation0]]
  $region30: #{tpu_custom_call.1} parent=0
    _
  %s6 = ssub.s32 1, %s4
  %s7 = scalar_select 0, %s6, %s4
  $region1: #{tpu_custom_call.1} parent=0
    #allocation2 [shape = 'u8[4096]{0}', space=vmem, size = 0x1000, scoped, tag = 'input window, operand 0, single buffered']
    #allocation3 [shape = 's32[1]{0}', space=sflag, size = 0x4, scoped, tag = 'scoped memory for tpu_custom_call.1']
    #allocation4 [shape = 's32[1]{0}', space=sflag, size = 0x4, scoped, tag = 'scoped memory for tpu_custom_call.1']
    #allocation5 [shape = 'u8[8192]{0}', space=vmem, size = 0x2000, scoped, tag = 'input window, operand 1, single buffered']
    #allocation6 [shape = 's32[1]{0}', space=sflag, size = 0x4, scoped, tag = 'scoped memory for tpu_custom_call.1']
    #allocation7 [shape = 'u8[4096]{0}', space=vmem, size = 0x1000, scoped, tag = 'output window, operand 0, single buffered']
    %8 = vsyncpa [#allocation3], 0
    %9 = vsyncpa [#allocation6], 0
    %10 = vsyncpa [#allocation4], 0
    // Predicated region
    $region2: #{tpu_custom_call.1} parent=1 // pred_check
      _
    $region3: #{tpu_custom_call.1} parent=1 // pred_check_branch
      %12 = sbr.rel (0) target = $region5
    $region4: #{tpu_custom_call.1} parent=1 // pred_region
      %14 = vsyncadd [#allocation3], 0
      %s15 = sshll.u32 %s0, 4
      %s16 = int_to_ptr.hbm [resolvable:$true] %s15
      %s17 = sshll.u32 [#allocation2], 4
      %s18 = int_to_ptr.vmem [resolvable:$true] %s17
      %23 = dma.hbm_to_vmem [thread:$0]  %s16, 128, %s18, [#allocation3], 64, 64, 4
    $region5: #{tpu_custom_call.1} parent=1 // pred_fallthru
      _
    // Predicated region
    $region6: #{tpu_custom_call.1} parent=1 // pred_check
      _
    $region7: #{tpu_custom_call.1} parent=1 // pred_check_branch
      %25 = sbr.rel (0) target = $region9
    $region8: #{tpu_custom_call.1} parent=1 // pred_region
      %27 = vsyncadd [#allocation6], 0
      %s28 = sshll.u32 %s1, 4
      %s29 = int_to_ptr.hbm [resolvable:$true] %s28
      %s30 = sshll.u32 [#allocation5], 4
      %s31 = int_to_ptr.vmem [resolvable:$true] %s30
      %36 = dma.hbm_to_vmem [thread:$0]  %s29, 256, %s31, [#allocation6], 64, 64, 4
    $region9: #{tpu_custom_call.1} parent=1 // pred_fallthru
      _
    // Predicated region
    $region10: #{tpu_custom_call.1} parent=1 // pred_check
      _
    $region11: #{tpu_custom_call.1} parent=1 // pred_check_branch
      %38 = sbr.rel (0) target = $region13
    $region12: #{tpu_custom_call.1} parent=1 // pred_region
      _
    $region13: #{tpu_custom_call.1} parent=1 // pred_fallthru
      _
    // Predicated region
    $region14: #{tpu_custom_call.1} parent=1 // pred_check
      _
    $region15: #{tpu_custom_call.1} parent=1 // pred_check_branch
      %40 = sbr.rel (0) target = $region17
    $region16: #{tpu_custom_call.1} parent=1 // pred_region
      %42 = dma.done [#allocation3], 128
    $region17: #{tpu_custom_call.1} parent=1 // pred_fallthru
      _
    // Predicated region
    $region18: #{tpu_custom_call.1} parent=1 // pred_check
      _
    $region19: #{tpu_custom_call.1} parent=1 // pred_check_branch
      %44 = sbr.rel (0) target = $region21
    $region20: #{tpu_custom_call.1} parent=1 // pred_region
      %46 = dma.done [#allocation6], 256
    $region21: #{tpu_custom_call.1} parent=1 // pred_fallthru
      _
    %v48 = vld [vmem:[#allocation2] sm:$0xf]
    %v49 = vld [vmem:[#allocation2 + $0x4] sm:$0xf]
    %v50 = vld [vmem:[#allocation5] sm:$0xf]
    %v51 = vld [vmem:[#allocation5 + $0x4] sm:$0xf]
    %v52 = vld [vmem:[#allocation5 + $0x8] sm:$0xf]
    %v53 = vld [vmem:[#allocation5 + $0xc] sm:$0xf]
    %v54 = vld [vmem:[%s2] sm:$0x1]
    %v56 = vperm.slane %v54, 0
    %v60 = vunpack.c.l.b16 %v48
    %v61 = vunpack.c.l.b16 %v49
    %v62 = vpack.c.b16 %v61, %v60
    %v67 = vunpack.c.l.b16 %v50
    %v68 = vunpack.c.l.b16 %v51
    %v69 = vunpack.c.l.b16 %v52
    %v70 = vunpack.c.l.b16 %v53
    %v71 = vpack.c.b16 %v68, %v67
    %v72 = vpack.c.b16 %v70, %v69
    %vm75 = vcmask 261120
    %v77 = vsel %vm75, %v62, 0
    %79 = vmatpush.bf16.msra.mxu0 0
    %80 = vmatpush.bf16.msra.mxu0 0
    %81 = vmatpush.bf16.msra.mxu0 0
    %82 = vmatpush.bf16.msra.mxu0 0
    %83 = vmatpush.bf16.msra.mxu0 0
    %84 = vmatpush.bf16.msra.mxu0 0
    %85 = vmatpush.bf16.msra.mxu0 %v72
    %86 = vmatpush.bf16.msra.mxu0 %v71
    %87 = vmatmul.bf16.gmra.mxu0 %v77
    %v88 = vpop.f32.mrf.mxu0
    %v89 = vadd.f32 %v56, %v88
    %v90 = vpop.f32.mrf.mxu0
    %v91 = vadd.f32 %v56, %v90
    %92 = vdwg.mxu0
    %v93 = vpack.c.bf16 %v89, %v89
    %v94 = vpack.c.bf16 %v91, %v91
    %vm95 = vcmask 781312
    %96 = vst.msk [vmem:[#allocation7] sm:$0xf] %vm95, %v93
    %97 = vst.msk [vmem:[#allocation7 + $0x4] sm:$0xf] %vm95, %v94
    // Predicated region
    $region22: #{tpu_custom_call.1} parent=1 // pred_check
      _
    $region23: #{tpu_custom_call.1} parent=1 // pred_check_branch
      %99 = sbr.rel (0) target = $region25
    $region24: #{tpu_custom_call.1} parent=1 // pred_region
      %101 = vsyncadd [#allocation4], 0
      %s102 = sshll.u32 [#allocation7], 4
      %s103 = int_to_ptr.vmem [resolvable:$true] %s102
      %s104 = sshll.u32 %s3, 4
      %s105 = int_to_ptr.hbm [resolvable:$true] %s104
      %110 = dma.vmem_to_hbm [thread:$0]  %s103, 128, %s105, [#allocation4], 64, 64, 4
    $region25: #{tpu_custom_call.1} parent=1 // pred_fallthru
      _
    // Predicated region
    $region26: #{tpu_custom_call.1} parent=1 // pred_check
      _
    $region27: #{tpu_custom_call.1} parent=1 // pred_check_branch
      %112 = sbr.rel (0) target = $region29
    $region28: #{tpu_custom_call.1} parent=1 // pred_region
      %114 = dma.done [#allocation4], 128
    $region29: #{tpu_custom_call.1} parent=1 // pred_fallthru
      _
    %115 = vsyncpa [#allocation3], 1
    %116 = vsyncpa [#allocation6], 1
    %117 = vsyncpa [#allocation4], 1

</llo_original>
